<compile_context>
chip_gen: v5e
topology: v5e:2x2
jax: 0.10.0
libtpu: 0.0.40
codegen_flags: <defaults>
</compile_context>

<pallas_src>
import math
import functools

import jax
import jax.numpy as jnp
from jax.experimental import pallas as pl
from jax.experimental.pallas import tpu as pltpu


def _round_up(x, m):
    return ((x + m - 1) // m) * m


# ----------------------------------------------------------------------------
# Fused kernel: token-type (+ position) embedding + residual add + LayerNorm
# ----------------------------------------------------------------------------

def _bert_embed_kernel(*refs, eps, use_position):
    if use_position:
        (tt_ids_ref, pos_ids_ref, feat_ref, tt_tab_ref, pos_tab_ref,
         g_ref, b_ref, o_ref) = refs
    else:
        tt_ids_ref, feat_ref, tt_tab_ref, g_ref, b_ref, o_ref = refs
        pos_ids_ref = pos_tab_ref = None

    feat = feat_ref[...].astype(jnp.float32)                   # (TR, H)
    tr = feat.shape[0]

    # token-type embedding lookup as one-hot @ table (MXU, no dynamic gather)
    tt_tab = tt_tab_ref[...].astype(jnp.float32)               # (V, H)
    tt_ids = tt_ids_ref[...]                                    # (TR, 1) int32
    tt_iota = jax.lax.broadcasted_iota(jnp.int32, (tr, tt_tab.shape[0]), 1)
    tt_oh = (tt_ids == tt_iota).astype(jnp.float32)             # (TR, V)
    emb = jnp.dot(tt_oh, tt_tab, preferred_element_type=jnp.float32) + feat

    if use_position:
        pos_tab = pos_tab_ref[...].astype(jnp.float32)          # (P, H)
        pos_ids = pos_ids_ref[...]                               # (TR, 1) int32
        p_iota = jax.lax.broadcasted_iota(jnp.int32, (tr, pos_tab.shape[0]), 1)
        pos_oh = (pos_ids == p_iota).astype(jnp.float32)         # (TR, P)
        emb = emb + jnp.dot(pos_oh, pos_tab, preferred_element_type=jnp.float32)

    # LayerNorm over hidden (f32 statistics, rsqrt -> EUP)
    mu = jnp.mean(emb, axis=-1, keepdims=True)
    d = emb - mu
    var = jnp.mean(d * d, axis=-1, keepdims=True)               # biased (torch LN)
    y = d * jax.lax.rsqrt(var + eps)
    y = y * g_ref[...].astype(jnp.float32) + b_ref[...].astype(jnp.float32)
    # TODO(synk): nn.Dropout(hidden_dropout_prob) treated as identity (inference).
    o_ref[...] = y.astype(o_ref.dtype)


def pallas_bert_embeddings(features, token_type_ids=None, position_ids=None, *,
                           token_type_table, position_table=None,
                           gamma, beta, eps=1e-12, row_tile=256):
    """Fused BertEmbeddings forward.  features: (..., hidden)."""
    orig_shape = features.shape
    hid = orig_shape[-1]
    n = int(math.prod(orig_shape[:-1]))

    if token_type_ids is None:
        token_type_ids = jnp.zeros(orig_shape[:-1], jnp.int32)
    use_position = position_ids is not None

    # ---- flatten + pad rows to a multiple of the row tile (>= 8 sublanes) ----
    tr = max(8, min(row_tile, _round_up(n, 8)))
    tr = _round_up(tr, 8)
    n_pad = _round_up(n, tr)

    feat2 = features.reshape(n, hid)
    feat2 = jnp.pad(feat2, ((0, n_pad - n), (0, 0)))
    tt2 = jnp.pad(token_type_ids.reshape(n, 1).astype(jnp.int32),
                  ((0, n_pad - n), (0, 0)))

    grid = (n_pad // tr,)

    in_specs = [pl.BlockSpec((tr, 1), lambda i: (i, 0))]        # token-type ids
    args = [tt2]
    if use_position:
        pos2 = jnp.pad(position_ids.reshape(n, 1).astype(jnp.int32),
                       ((0, n_pad - n), (0, 0)))
        in_specs.append(pl.BlockSpec((tr, 1), lambda i: (i, 0)))
        args.append(pos2)

    in_specs.append(pl.BlockSpec((tr, hid), lambda i: (i, 0)))  # features tile
    args.append(feat2)

    v = token_type_table.shape[0]
    in_specs.append(pl.BlockSpec((v, hid), lambda i: (0, 0)))   # resident table
    args.append(token_type_table)
    if use_position:
        p = position_table.shape[0]
        in_specs.append(pl.BlockSpec((p, hid), lambda i: (0, 0)))
        args.append(position_table)

    in_specs.append(pl.BlockSpec((1, hid), lambda i: (0, 0)))   # gamma (resident)
    args.append(gamma.reshape(1, hid))
    in_specs.append(pl.BlockSpec((1, hid), lambda i: (0, 0)))   # beta (resident)
    args.append(beta.reshape(1, hid))

    # VMEM budget: double-buffered feature/output tiles + ids + resident tables,
    # with generous headroom; stays well under the v7x 64 MiB physical ceiling.
    itm = jnp.dtype(features.dtype).itemsize
    tile_bytes = tr * hid * max(itm, 4)
    table_bytes = token_type_table.size * 4 + 2 * hid * 4
    if use_position:
        table_bytes += position_table.size * 4
    vmem_limit = int(min(96 * 2**20, max(4 * 2**20,
                                         8 * tile_bytes + 2 * table_bytes + 2**20)))

    out = pl.pallas_call(
        functools.partial(_bert_embed_kernel, eps=eps, use_position=use_position),
        out_shape=jax.ShapeDtypeStruct((n_pad, hid), features.dtype),
        grid=grid,
        in_specs=in_specs,
        out_specs=pl.BlockSpec((tr, hid), lambda i: (i, 0)),
        compiler_params=pltpu.CompilerParams(
            dimension_semantics=("parallel",),
            vmem_limit_bytes=vmem_limit),
    )(*args)

    return out[:n].reshape(orig_shape)


# ----------------------------------------------------------------------------
# Pure-JAX reference (for correctness check)
# ----------------------------------------------------------------------------

def ref_bert_embeddings(features, token_type_ids, position_ids,
                        token_type_table, position_table, gamma, beta, eps):
    if token_type_ids is None:
        token_type_ids = jnp.zeros(features.shape[:-1], jnp.int32)
    emb = token_type_table[token_type_ids] + features
    if position_ids is not None:
        emb = emb + position_table[position_ids]
    mu = jnp.mean(emb, axis=-1, keepdims=True)
    var = jnp.mean((emb - mu) ** 2, axis=-1, keepdims=True)
    return (emb - mu) * jax.lax.rsqrt(var + eps) * gamma + beta


# ----------------------------------------------------------------------------
# Example run
# ----------------------------------------------------------------------------

if __name__ == "__main__":
    batch, seq, hidden = 2, 16, 128          # hidden lane-dense (multiple of 128)
    type_vocab_size = 2
    max_position_embeddings = 32
    layer_norm_eps = 1e-12
    init_range = 0.02

    key = jax.random.PRNGKey(0)
    k_feat, k_tt, k_ttab, k_ptab, k_g, k_b = jax.random.split(key, 6)

    features = jax.random.normal(k_feat, (batch, seq, hidden), jnp.float32)
    input_ids = jnp.zeros((batch, seq), jnp.int32)          # unused by forward
    token_type_ids = jax.random.randint(k_tt, (batch, seq), 0, type_vocab_size)
    position_ids = jnp.broadcast_to(jnp.arange(seq, dtype=jnp.int32)[None, :],
                                    (batch, seq))

    token_type_table = jax.random.normal(
        k_ttab, (type_vocab_size, hidden), jnp.float32) * init_range
    position_table = jax.random.normal(
        k_ptab, (max_position_embeddings, hidden), jnp.float32) * init_range
    gamma = 1.0 + 0.1 * jax.random.normal(k_g, (hidden,), jnp.float32)
    beta = 0.1 * jax.random.normal(k_b, (hidden,), jnp.float32)

    # Branch 1: position_ids provided
    out_pos = pallas_bert_embeddings(
        features, token_type_ids, position_ids,
        token_type_table=token_type_table, position_table=position_table,
        gamma=gamma, beta=beta, eps=layer_norm_eps)
    out_pos = jax.block_until_ready(out_pos)
    ref_pos = ref_bert_embeddings(features, token_type_ids, position_ids,
                                  token_type_table, position_table,
                                  gamma, beta, layer_norm_eps)

    # Branch 2: position_ids is None (token-type + features only)
    out_nopos = pallas_bert_embeddings(
        features, token_type_ids, None,
        token_type_table=token_type_table, position_table=None,
        gamma=gamma, beta=beta, eps=layer_norm_eps)
    out_nopos = jax.block_until_ready(out_nopos)
    ref_nopos = ref_bert_embeddings(features, token_type_ids, None,
                                    token_type_table, position_table,
                                    gamma, beta, layer_norm_eps)

    assert out_pos.shape == (batch, seq, hidden) and out_pos.dtype == jnp.float32
    assert out_nopos.shape == (batch, seq, hidden)
    assert jnp.allclose(out_pos, ref_pos, atol=1e-5, rtol=1e-5)
    assert jnp.allclose(out_nopos, ref_nopos, atol=1e-5, rtol=1e-5)
    print("KERNEL_OK")
</pallas_src>

<mosaic_0001>
module attributes {stable_mosaic.version = 11 : i64} {
  func.func @_bert_embed_kernel(%arg0: i32, %arg1: memref<32x1xi32, #tpu.memory_space<vmem>>, %arg2: memref<32x1xi32, #tpu.memory_space<vmem>>, %arg3: memref<32x128xf32, #tpu.memory_space<vmem>>, %arg4: memref<2x128xf32, #tpu.memory_space<vmem>>, %arg5: memref<32x128xf32, #tpu.memory_space<vmem>>, %arg6: memref<1x128xf32, #tpu.memory_space<vmem>>, %arg7: memref<1x128xf32, #tpu.memory_space<vmem>>, %arg8: memref<32x128xf32, #tpu.memory_space<vmem>>) attributes {dimension_semantics = [#tpu.dimension_semantics<parallel>], iteration_bounds = array<i64: 1>, scalar_prefetch = 0 : i64, scratch_operands = 0 : i64, tpu.core_type = #tpu.core_type<tc>, window_params = [{transform_indices = @transform_0, window_bounds = array<i64: 32, 1>}, {transform_indices = @transform_1, window_bounds = array<i64: 32, 1>}, {transform_indices = @transform_2, window_bounds = array<i64: 32, 128>}, {pipeline_mode = #tpu.pipeline_mode<synchronous>, transform_indices = @transform_3, window_bounds = array<i64: 2, 128>}, {pipeline_mode = #tpu.pipeline_mode<synchronous>, transform_indices = @transform_4, window_bounds = array<i64: 32, 128>}, {pipeline_mode = #tpu.pipeline_mode<synchronous>, transform_indices = @transform_5, window_bounds = array<i64: 1, 128>}, {pipeline_mode = #tpu.pipeline_mode<synchronous>, transform_indices = @transform_6, window_bounds = array<i64: 1, 128>}, {transform_indices = @transform_7, window_bounds = array<i64: 32, 128>}]} {
    %c0 = arith.constant 0 : index
    %c0_0 = arith.constant 0 : index
    %0 = vector.load %arg3[%c0, %c0_0] : memref<32x128xf32, #tpu.memory_space<vmem>>, vector<32x128xf32>
    %c0_1 = arith.constant 0 : index
    %c0_2 = arith.constant 0 : index
    %1 = vector.load %arg4[%c0_1, %c0_2] : memref<2x128xf32, #tpu.memory_space<vmem>>, vector<2x128xf32>
    %c0_3 = arith.constant 0 : index
    %c0_4 = arith.constant 0 : index
    %2 = vector.load %arg1[%c0_3, %c0_4] : memref<32x1xi32, #tpu.memory_space<vmem>>, vector<32x1xi32>
    %3 = tpu.iota {dimensions = array<i32: 1>} : vector<32x2xi32>
    %4 = vector.broadcast %2 : vector<32x1xi32> to vector<32x2xi32>
    %5 = arith.cmpi eq, %4, %3 : vector<32x2xi32>
    %6 = arith.extui %5 : vector<32x2xi1> to vector<32x2xi32>
    %7 = arith.sitofp %6 : vector<32x2xi32> to vector<32x2xf32>
    %cst = arith.constant dense<0.000000e+00> : vector<32x128xf32>
    %8 = tpu.matmul %7, %1, %cst {dimension_numbers = #tpu.dot_dimension_numbers<[1], [0], [0], [1], [0, 0, 1, 1], [], []>} : vector<32x2xf32>, vector<2x128xf32>, vector<32x128xf32> -> vector<32x128xf32>
    %9 = arith.addf %8, %0 : vector<32x128xf32>
    %c0_5 = arith.constant 0 : index
    %c0_6 = arith.constant 0 : index
    %10 = vector.load %arg5[%c0_5, %c0_6] : memref<32x128xf32, #tpu.memory_space<vmem>>, vector<32x128xf32>
    %c0_7 = arith.constant 0 : index
    %c0_8 = arith.constant 0 : index
    %11 = vector.load %arg2[%c0_7, %c0_8] : memref<32x1xi32, #tpu.memory_space<vmem>>, vector<32x1xi32>
    %12 = tpu.iota {dimensions = array<i32: 1>} : vector<32x32xi32>
    %13 = vector.broadcast %11 : vector<32x1xi32> to vector<32x32xi32>
    %14 = arith.cmpi eq, %13, %12 : vector<32x32xi32>
    %15 = arith.extui %14 : vector<32x32xi1> to vector<32x32xi32>
    %16 = arith.sitofp %15 : vector<32x32xi32> to vector<32x32xf32>
    %cst_9 = arith.constant dense<0.000000e+00> : vector<32x128xf32>
    %17 = tpu.matmul %16, %10, %cst_9 {dimension_numbers = #tpu.dot_dimension_numbers<[1], [0], [0], [1], [0, 0, 1, 1], [], []>} : vector<32x32xf32>, vector<32x128xf32>, vector<32x128xf32> -> vector<32x128xf32>
    %18 = arith.addf %9, %17 : vector<32x128xf32>
    %cst_10 = arith.constant dense<0.000000e+00> : vector<32xf32>
    %19 = vector.multi_reduction <add>, %18, %cst_10 [1] : vector<32x128xf32> to vector<32xf32>
    %20 = vector.shape_cast %19 : vector<32xf32> to vector<32x1xf32>
    %cst_11 = arith.constant 1.280000e+02 : f32
    %21 = vector.broadcast %cst_11 : f32 to vector<32x1xf32>
    %22 = arith.divf %20, %21 : vector<32x1xf32>
    %23 = vector.broadcast %22 : vector<32x1xf32> to vector<32x128xf32>
    %24 = arith.subf %18, %23 : vector<32x128xf32>
    %25 = arith.mulf %24, %24 : vector<32x128xf32>
    %cst_12 = arith.constant dense<0.000000e+00> : vector<32xf32>
    %26 = vector.multi_reduction <add>, %25, %cst_12 [1] : vector<32x128xf32> to vector<32xf32>
    %27 = vector.shape_cast %26 : vector<32xf32> to vector<32x1xf32>
    %cst_13 = arith.constant 1.280000e+02 : f32
    %28 = vector.broadcast %cst_13 : f32 to vector<32x1xf32>
    %29 = arith.divf %27, %28 : vector<32x1xf32>
    %cst_14 = arith.constant 9.99999996E-13 : f32
    %30 = vector.broadcast %cst_14 : f32 to vector<32x1xf32>
    %31 = arith.addf %29, %30 : vector<32x1xf32>
    %32 = math.rsqrt %31 : vector<32x1xf32>
    %33 = vector.broadcast %32 : vector<32x1xf32> to vector<32x128xf32>
    %34 = arith.mulf %24, %33 : vector<32x128xf32>
    %c0_15 = arith.constant 0 : index
    %c0_16 = arith.constant 0 : index
    %35 = vector.load %arg6[%c0_15, %c0_16] : memref<1x128xf32, #tpu.memory_space<vmem>>, vector<1x128xf32>
    %36 = vector.broadcast %35 : vector<1x128xf32> to vector<32x128xf32>
    %37 = arith.mulf %34, %36 : vector<32x128xf32>
    %c0_17 = arith.constant 0 : index
    %c0_18 = arith.constant 0 : index
    %38 = vector.load %arg7[%c0_17, %c0_18] : memref<1x128xf32, #tpu.memory_space<vmem>>, vector<1x128xf32>
    %39 = vector.broadcast %38 : vector<1x128xf32> to vector<32x128xf32>
    %40 = arith.addf %37, %39 : vector<32x128xf32>
    %c0_19 = arith.constant 0 : index
    %c0_20 = arith.constant 0 : index
    %41 = vector.load %arg8[%c0_19, %c0_20] : memref<32x128xf32, #tpu.memory_space<vmem>>, vector<32x128xf32>
    tpu.vector_store %arg8[%c0_19, %c0_20], %40 {strides = array<i32>} : memref<32x128xf32, #tpu.memory_space<vmem>>, vector<32x128xf32>,
    return
  }
  func.func @transform_0(%arg0: i32) -> (i32, i32) {
    %c0_i32 = arith.constant 0 : i32
    %c0_i32_0 = arith.constant 0 : i32
    return %arg0, %c0_i32 : i32, i32
  }
  func.func @transform_1(%arg0: i32) -> (i32, i32) {
    %c0_i32 = arith.constant 0 : i32
    %c0_i32_0 = arith.constant 0 : i32
    return %arg0, %c0_i32 : i32, i32
  }
  func.func @transform_2(%arg0: i32) -> (i32, i32) {
    %c0_i32 = arith.constant 0 : i32
    %c0_i32_0 = arith.constant 0 : i32
    return %arg0, %c0_i32 : i32, i32
  }
  func.func @transform_3(%arg0: i32) -> (i32, i32) {
    %c0_i32 = arith.constant 0 : i32
    %c0_i32_0 = arith.constant 0 : i32
    %c0_i32_1 = arith.constant 0 : i32
    return %c0_i32, %c0_i32_0 : i32, i32
  }
  func.func @transform_4(%arg0: i32) -> (i32, i32) {
    %c0_i32 = arith.constant 0 : i32
    %c0_i32_0 = arith.constant 0 : i32
    %c0_i32_1 = arith.constant 0 : i32
    return %c0_i32, %c0_i32_0 : i32, i32
  }
  func.func @transform_5(%arg0: i32) -> (i32, i32) {
    %c0_i32 = arith.constant 0 : i32
    %c0_i32_0 = arith.constant 0 : i32
    %c0_i32_1 = arith.constant 0 : i32
    return %c0_i32, %c0_i32_0 : i32, i32
  }
  func.func @transform_6(%arg0: i32) -> (i32, i32) {
    %c0_i32 = arith.constant 0 : i32
    %c0_i32_0 = arith.constant 0 : i32
    %c0_i32_1 = arith.constant 0 : i32
    return %c0_i32, %c0_i32_0 : i32, i32
  }
  func.func @transform_7(%arg0: i32) -> (i32, i32) {
    %c0_i32 = arith.constant 0 : i32
    %c0_i32_0 = arith.constant 0 : i32
    return %arg0, %c0_i32 : i32, i32
  }
}

</mosaic_0001>

<llo_original>
// kernel: tpu_custom_call.1
$region0: #{tpu_custom_call.1}
  #allocation0 [shape = 'u32[]', space=smem, size = 0x4, offset = 0x4, fixed_abs, tag = 'smem constant byte address 0x4 - core index']
  #allocation1 [shape = 'u32[72,128]{1,0:T(1,128)}', space=vmem, size = 0x9000, scoped, tag = 'internal scratch']
  %s0 = inlined_call_operand.vmem [shape: s32[32,1], index: 0, kind: input, shape index: {}]
  %s1 = inlined_call_operand.vmem [shape: s32[32,1], index: 1, kind: input, shape index: {}]
  %s2 = inlined_call_operand.vmem [shape: f32[32,128], index: 2, kind: input, shape index: {}]
  %s3 = inlined_call_operand.vmem [shape: f32[2,128], index: 3, kind: input, shape index: {}]
  %s4 = inlined_call_operand.vmem [shape: f32[32,128], index: 4, kind: input, shape index: {}]
  %s5 = inlined_call_operand.vmem [shape: f32[1,128], index: 5, kind: input, shape index: {}]
  %s6 = inlined_call_operand.vmem [shape: f32[1,128], index: 6, kind: input, shape index: {}]
  %s7 = inlined_call_operand.hbm [shape: f32[32,128], index: 7, kind: output, shape index: {}]
  %s8 = sld [smem:[#allocation0]]
  $region38: #{tpu_custom_call.1} parent=0
    _
  %s10 = ssub.s32 1, %s8
  %s11 = scalar_select 0, %s10, %s8
  $region1: #{tpu_custom_call.1} parent=0
    #allocation2 [shape = 'u8[16384]{0}', space=vmem, size = 0x4000, scoped, tag = 'output window, operand 0, single buffered']
    #allocation3 [shape = 's32[1]{0}', space=sflag, size = 0x4, scoped, tag = 'scoped memory for tpu_custom_call.1']
    %12 = vsyncpa [#allocation3], 0
    // Predicated region
    $region2: #{tpu_custom_call.1} parent=1 // pred_check
      _
    $region3: #{tpu_custom_call.1} parent=1 // pred_check_branch
      %14 = sbr.rel (0) target = $region5
    $region4: #{tpu_custom_call.1} parent=1 // pred_region
      _
    $region5: #{tpu_custom_call.1} parent=1 // pred_fallthru
      _
    // Predicated region
    $region6: #{tpu_custom_call.1} parent=1 // pred_check
      _
    $region7: #{tpu_custom_call.1} parent=1 // pred_check_branch
      %16 = sbr.rel (0) target = $region9
    $region8: #{tpu_custom_call.1} parent=1 // pred_region
      _
    $region9: #{tpu_custom_call.1} parent=1 // pred_fallthru
      _
    // Predicated region
    $region10: #{tpu_custom_call.1} parent=1 // pred_check
      _
    $region11: #{tpu_custom_call.1} parent=1 // pred_check_branch
      %18 = sbr.rel (0) target = $region13
    $region12: #{tpu_custom_call.1} parent=1 // pred_region
      _
    $region13: #{tpu_custom_call.1} parent=1 // pred_fallthru
      _
    // Predicated region
    $region14: #{tpu_custom_call.1} parent=1 // pred_check
      _
    $region15: #{tpu_custom_call.1} parent=1 // pred_check_branch
      %20 = sbr.rel (0) target = $region17
    $region16: #{tpu_custom_call.1} parent=1 // pred_region
      _
    $region17: #{tpu_custom_call.1} parent=1 // pred_fallthru
      _
    // Predicated region
    $region18: #{tpu_custom_call.1} parent=1 // pred_check
      _
    $region19: #{tpu_custom_call.1} parent=1 // pred_check_branch
      %22 = sbr.rel (0) target = $region21
    $region20: #{tpu_custom_call.1} parent=1 // pred_region
      _
    $region21: #{tpu_custom_call.1} parent=1 // pred_fallthru
      _
    // Predicated region
    $region22: #{tpu_custom_call.1} parent=1 // pred_check
      _
    $region23: #{tpu_custom_call.1} parent=1 // pred_check_branch
      %24 = sbr.rel (0) target = $region25
    $region24: #{tpu_custom_call.1} parent=1 // pred_region
      _
    $region25: #{tpu_custom_call.1} parent=1 // pred_fallthru
      _
    // Predicated region
    $region26: #{tpu_custom_call.1} parent=1 // pred_check
      _
    $region27: #{tpu_custom_call.1} parent=1 // pred_check_branch
      %26 = sbr.rel (0) target = $region29
    $region28: #{tpu_custom_call.1} parent=1 // pred_region
      _
    $region29: #{tpu_custom_call.1} parent=1 // pred_fallthru
      _
    %v27 = vld [vmem:[%s2] sm:$0xff]
    %v28 = vld [vmem:[%s2 + $0x8] sm:$0xff]
    %v29 = vld [vmem:[%s2 + $0x10] sm:$0xff]
    %v30 = vld [vmem:[%s2 + $0x18] sm:$0xff]
    %v31 = vld [vmem:[%s3] sm:$0x3]
    %v32 = vld [vmem:[%s0] sm:$0xff]
    %v33 = vld [vmem:[%s0 + $0x8] sm:$0xff]
    %v34 = vld [vmem:[%s0 + $0x10] sm:$0xff]
    %v35 = vld [vmem:[%s0 + $0x18] sm:$0xff]
    %v36 = vlaneseq
    %v37 = vand.u32 %v36, 127
    %38 = vset.pattern.permute.xlu0 0
    %39 = vperm.xlu0 %38, %v32
    %v40 = vpop.permute.xlu0 %39
    %41 = vset.pattern.permute.xlu0 0
    %42 = vperm.xlu0 %41, %v33
    %v43 = vpop.permute.xlu0 %42
    %44 = vset.pattern.permute.xlu0 0
    %45 = vperm.xlu0 %44, %v34
    %v46 = vpop.permute.xlu0 %45
    %47 = vset.pattern.permute.xlu0 0
    %48 = vperm.xlu0 %47, %v35
    %v49 = vpop.permute.xlu0 %48
    %vm50 = vcmp.eq.s32.totalorder %v40, %v37
    %vm51 = vcmp.eq.s32.totalorder %v43, %v37
    %vm52 = vcmp.eq.s32.totalorder %v46, %v37
    %vm53 = vcmp.eq.s32.totalorder %v49, %v37
    %v54 = vsel %vm50, 1, 0
    %v55 = vsel %vm51, 1, 0
    %v56 = vsel %vm52, 1, 0
    %v57 = vsel %vm53, 1, 0
    %v58 = vcvt.s32.f32 %v54
    %v59 = vcvt.s32.f32 %v55
    %v60 = vcvt.s32.f32 %v56
    %v61 = vcvt.s32.f32 %v57
    %vm62 = vcmask 15360
    %v64 = vsel %vm62, %v58, 0
    %v67 = vsel %vm62, %v59, 0
    %v70 = vsel %vm62, %v60, 0
    %v73 = vsel %vm62, %v61, 0
    %vm75 = vcmask 1041408
    %v77 = vsel %vm75, %v31, 0
    %79 = vmatpush.msra.mxu0 0.0
    %80 = vmatpush.msra.mxu0 0.0
    %81 = vmatpush.msra.mxu0 0.0
    %82 = vmatpush.msra.mxu0 0.0
    %83 = vmatpush.msra.mxu0 0.0
    %84 = vmatpush.msra.mxu0 0.0
    %85 = vmatpush.msra.mxu0 0.0
    %86 = vmatpush.msra.mxu0 0.0
    %87 = vmatpush.msra.mxu0 0.0
    %88 = vmatpush.msra.mxu0 0.0
    %89 = vmatpush.msra.mxu0 0.0
    %90 = vmatpush.msra.mxu0 0.0
    %91 = vmatpush.msra.mxu0 0.0
    %92 = vmatpush.msra.mxu0 0.0
    %93 = vmatpush.msra.mxu0 0.0
    %94 = vmatpush.msra.mxu0 %v77
    %95 = vmatmul.f32.gmra.mxu0 %v64
    %v96 = vpop.f32.mrf.mxu0
    %v97 = vadd.f32 %v27, %v96
    %98 = vmatmul.f32.gmra.mxu0 %v67
    %v99 = vpop.f32.mrf.mxu0
    %v100 = vadd.f32 %v28, %v99
    %101 = vmatmul.f32.gmra.mxu0 %v70
    %v102 = vpop.f32.mrf.mxu0
    %v103 = vadd.f32 %v29, %v102
    %104 = vmatmul.f32.gmra.mxu0 %v73
    %v105 = vpop.f32.mrf.mxu0
    %v106 = vadd.f32 %v30, %v105
    %107 = vdwg.mxu0
    %v108 = vld [vmem:[%s4] sm:$0xff]
    %v109 = vld [vmem:[%s4 + $0x8] sm:$0xff]
    %v110 = vld [vmem:[%s4 + $0x10] sm:$0xff]
    %v111 = vld [vmem:[%s4 + $0x18] sm:$0xff]
    %v112 = vld [vmem:[%s1] sm:$0xff]
    %v113 = vld [vmem:[%s1 + $0x8] sm:$0xff]
    %v114 = vld [vmem:[%s1 + $0x10] sm:$0xff]
    %v115 = vld [vmem:[%s1 + $0x18] sm:$0xff]
    %116 = vset.pattern.permute.xlu0 0
    %117 = vperm.xlu0 %116, %v112
    %v118 = vpop.permute.xlu0 %117
    %119 = vset.pattern.permute.xlu0 0
    %120 = vperm.xlu0 %119, %v113
    %v121 = vpop.permute.xlu0 %120
    %122 = vset.pattern.permute.xlu0 0
    %123 = vperm.xlu0 %122, %v114
    %v124 = vpop.permute.xlu0 %123
    %125 = vset.pattern.permute.xlu0 0
    %126 = vperm.xlu0 %125, %v115
    %v127 = vpop.permute.xlu0 %126
    %vm128 = vcmp.eq.s32.totalorder %v118, %v37
    %vm129 = vcmp.eq.s32.totalorder %v121, %v37
    %vm130 = vcmp.eq.s32.totalorder %v124, %v37
    %vm131 = vcmp.eq.s32.totalorder %v127, %v37
    %v132 = vsel %vm128, 1, 0
    %v133 = vsel %vm129, 1, 0
    %v134 = vsel %vm130, 1, 0
    %v135 = vsel %vm131, 1, 0
    %v136 = vcvt.s32.f32 %v132
    %v137 = vcvt.s32.f32 %v133
    %v138 = vcvt.s32.f32 %v134
    %v139 = vcvt.s32.f32 %v135
    %vm140 = vcmask 261120
    %v142 = vsel %vm140, %v136, 0
    %v145 = vsel %vm140, %v137, 0
    %v148 = vsel %vm140, %v138, 0
    %v151 = vsel %vm140, %v139, 0
    %153 = vmatpush.msra.mxu0 0.0
    %154 = vmatpush.msra.mxu0 0.0
    %155 = vmatpush.msra.mxu0 0.0
    %156 = vmatpush.msra.mxu0 0.0
    %157 = vmatpush.msra.mxu0 0.0
    %158 = vmatpush.msra.mxu0 0.0
    %159 = vmatpush.msra.mxu0 0.0
    %160 = vmatpush.msra.mxu0 0.0
    %161 = vmatpush.msra.mxu0 0.0
    %162 = vmatpush.msra.mxu0 0.0
    %163 = vmatpush.msra.mxu0 0.0
    %164 = vmatpush.msra.mxu0 0.0
    %165 = vmatpush.msra.mxu0 %v111
    %166 = vmatpush.msra.mxu0 %v110
    %167 = vmatpush.msra.mxu0 %v109
    %168 = vmatpush.msra.mxu0 %v108
    %169 = vmatmul.f32.gmra.mxu0 %v142
    %v170 = vpop.f32.mrf.mxu0
    %v171 = vadd.f32 0.0, %v170
    %172 = vmatmul.f32.gmra.mxu0 %v145
    %v173 = vpop.f32.mrf.mxu0
    %v174 = vadd.f32 0.0, %v173
    %175 = vmatmul.f32.gmra.mxu0 %v148
    %v176 = vpop.f32.mrf.mxu0
    %v177 = vadd.f32 0.0, %v176
    %178 = vmatmul.f32.gmra.mxu0 %v151
    %v179 = vpop.f32.mrf.mxu0
    %v180 = vadd.f32 0.0, %v179
    %181 = vdwg.mxu0
    %v182 = vadd.f32 %v97, %v171
    %v183 = vadd.f32 %v100, %v174
    %v184 = vadd.f32 %v103, %v177
    %v185 = vadd.f32 %v106, %v180
    %186 = vadd.xlane.f32.xlu0 %v182
    %v187 = vpop.xlane.xlu0 %186
    %188 = vadd.xlane.f32.xlu0 %v183
    %v189 = vpop.xlane.xlu0 %188
    %190 = vadd.xlane.f32.xlu0 %v184
    %v191 = vpop.xlane.xlu0 %190
    %192 = vadd.xlane.f32.xlu0 %v185
    %v193 = vpop.xlane.xlu0 %192
    %v194 = vrcp.pop 128.0
    %v195 = vmul.f32 128.0, %v194
    %v196 = vsub.f32 1.0, %v195
    %v197 = vmul.f32 %v194, %v196
    %v198 = vadd.f32 %v194, %v197
    %vm199 = vweird.f32 %v194
    %v200 = vsel %vm199, %v194, %v198
    %v201 = vmul.f32 %v187, %v200
    %v202 = vmul.f32 %v189, %v200
    %v203 = vmul.f32 %v191, %v200
    %v204 = vmul.f32 %v193, %v200
    %v205 = vsub.f32 %v182, %v201
    %v206 = vsub.f32 %v183, %v202
    %v207 = vsub.f32 %v184, %v203
    %v208 = vsub.f32 %v185, %v204
    %v209 = vmul.f32 %v205, %v205
    %v210 = vmul.f32 %v206, %v206
    %v211 = vmul.f32 %v207, %v207
    %v212 = vmul.f32 %v208, %v208
    %213 = vadd.xlane.f32.xlu0 %v209
    %v214 = vpop.xlane.xlu0 %213
    %215 = vadd.xlane.f32.xlu0 %v210
    %v216 = vpop.xlane.xlu0 %215
    %217 = vadd.xlane.f32.xlu0 %v211
    %v218 = vpop.xlane.xlu0 %217
    %219 = vadd.xlane.f32.xlu0 %v212
    %v220 = vpop.xlane.xlu0 %219
    %v221 = vmul.f32 %v214, %v200
    %v222 = vmul.f32 %v216, %v200
    %v223 = vmul.f32 %v218, %v200
    %v224 = vmul.f32 %v220, %v200
    %v225 = vadd.f32 %v221, 1e-12
    %v226 = vadd.f32 %v222, 1e-12
    %v227 = vadd.f32 %v223, 1e-12
    %v228 = vadd.f32 %v224, 1e-12
    %v229 = vrsqrt.pop %v225
    %v230 = vmul.f32 %v229, %v225
    %v231 = vmul.f32 %v230, %v229
    %v232 = vmul.f32 0.5, %v231
    %v233 = vsub.f32 1.5, %v232
    %v234 = vmul.f32 %v229, %v233
    %vm235 = vweird.f32 %v225
    %vm236 = vweird.f32 %v229
    %vm237 = vmor %vm235, %vm236
    %v238 = vsel %vm237, %v229, %v234
    %v239 = vrsqrt.pop %v226
    %v240 = vmul.f32 %v239, %v226
    %v241 = vmul.f32 %v240, %v239
    %v242 = vmul.f32 0.5, %v241
    %v243 = vsub.f32 1.5, %v242
    %v244 = vmul.f32 %v239, %v243
    %vm245 = vweird.f32 %v226
    %vm246 = vweird.f32 %v239
    %vm247 = vmor %vm245, %vm246
    %v248 = vsel %vm247, %v239, %v244
    %v249 = vrsqrt.pop %v227
    %v250 = vmul.f32 %v249, %v227
    %v251 = vmul.f32 %v250, %v249
    %v252 = vmul.f32 0.5, %v251
    %v253 = vsub.f32 1.5, %v252
    %v254 = vmul.f32 %v249, %v253
    %vm255 = vweird.f32 %v227
    %vm256 = vweird.f32 %v249
    %vm257 = vmor %vm255, %vm256
    %v258 = vsel %vm257, %v249, %v254
    %v259 = vrsqrt.pop %v228
    %v260 = vmul.f32 %v259, %v228
    %v261 = vmul.f32 %v260, %v259
    %v262 = vmul.f32 0.5, %v261
    %v263 = vsub.f32 1.5, %v262
    %v264 = vmul.f32 %v259, %v263
    %vm265 = vweird.f32 %v228
    %vm266 = vweird.f32 %v259
    %vm267 = vmor %vm265, %vm266
    %v268 = vsel %vm267, %v259, %v264
    %v269 = vmul.f32 %v205, %v238
    %v270 = vmul.f32 %v206, %v248
    %v271 = vmul.f32 %v207, %v258
    %v272 = vmul.f32 %v208, %v268
    %v273 = vld [vmem:[%s5] sm:$0x1]
    %v275 = vperm.slane %v273, 0
    %v277 = vmul.f32 %v269, %v275
    %v278 = vmul.f32 %v270, %v275
    %v279 = vmul.f32 %v271, %v275
    %v280 = vmul.f32 %v272, %v275
    %v281 = vld [vmem:[%s6] sm:$0x1]
    %v283 = vperm.slane %v281, 0
    %v285 = vadd.f32 %v277, %v283
    %v286 = vadd.f32 %v278, %v283
    %v287 = vadd.f32 %v279, %v283
    %v288 = vadd.f32 %v280, %v283
    %289 = vst [vmem:[#allocation2] sm:$0xff] %v285
    %290 = vst [vmem:[#allocation2 + $0x8] sm:$0xff] %v286
    %291 = vst [vmem:[#allocation2 + $0x10] sm:$0xff] %v287
    %292 = vst [vmem:[#allocation2 + $0x18] sm:$0xff] %v288
    // Predicated region
    $region30: #{tpu_custom_call.1} parent=1 // pred_check
      _
    $region31: #{tpu_custom_call.1} parent=1 // pred_check_branch
      %294 = sbr.rel (0) target = $region33
    $region32: #{tpu_custom_call.1} parent=1 // pred_region
      %296 = vsyncadd [#allocation3], 0
      %s297 = sshll.u32 [#allocation2], 4
      %s298 = int_to_ptr.vmem [resolvable:$true] %s297
      %s299 = sshll.u32 %s7, 4
      %s300 = int_to_ptr.hbm [resolvable:$true] %s299
      %305 = dma.vmem_to_hbm [thread:$0]  %s298, 512, %s300, [#allocation3], 128, 128, 8
    $region33: #{tpu_custom_call.1} parent=1 // pred_fallthru
      _
    // Predicated region
    $region34: #{tpu_custom_call.1} parent=1 // pred_check
      _
    $region35: #{tpu_custom_call.1} parent=1 // pred_check_branch
      %307 = sbr.rel (0) target = $region37
    $region36: #{tpu_custom_call.1} parent=1 // pred_region
      %309 = dma.done [#allocation3], 512
    $region37: #{tpu_custom_call.1} parent=1 // pred_fallthru
      _
    %310 = vsyncpa [#allocation3], 1

</llo_original>
